<compile_context>
chip_gen: v7x
topology: tpu7x:2x2x1
jax: 0.10.0
libtpu: 0.0.40
codegen_flags: <defaults>
</compile_context>

<pallas_src>
import jax
import jax.numpy as jnp
from jax.experimental import pallas as pl
from jax.experimental.pallas import tpu as pltpu

EPS = 1e-5
NEG_SLOPE = 0.1


def _leaky_relu(x):
    return jnp.where(x >= 0, x, NEG_SLOPE * x)


def _layernorm(x, gamma, beta):
    # Two-pass LayerNorm in f32 (matches nn.LayerNorm numerics); rsqrt -> EUP.
    mean = jnp.mean(x, axis=-1, keepdims=True)
    xc = x - mean
    var = jnp.mean(xc * xc, axis=-1, keepdims=True)
    inv = jax.lax.rsqrt(var + EPS)
    return xc * inv * gamma + beta


def resblock_kernel(x_ref, w1_ref, w2_ref, vec_ref, o_ref):
    x_in = x_ref[...]                                  # (TM, D), I/O dtype
    x = x_in.astype(jnp.float32)                       # residual kept in f32
    vecs = vec_ref[...]                                # (8, D) f32: b1,g1,be1,b2,g2,be2,pad,pad
    b1, g1, be1 = vecs[0:1], vecs[1:2], vecs[2:3]
    b2, g2, be2 = vecs[3:4], vecs[4:5], vecs[5:6]

    # fc1 -> LayerNorm -> LeakyReLU   (matmul operands in weight dtype, f32 accumulation)
    h = jnp.dot(x_in.astype(w1_ref.dtype), w1_ref[...],
                preferred_element_type=jnp.float32) + b1
    h = _leaky_relu(_layernorm(h, g1, be1))

    # fc2 -> LayerNorm
    out = jnp.dot(h.astype(w2_ref.dtype), w2_ref[...],
                  preferred_element_type=jnp.float32) + b2
    out = _layernorm(out, g2, be2)

    # + residual -> LeakyReLU
    o_ref[...] = _leaky_relu(out + x).astype(o_ref.dtype)


def _round_up(v, m):
    return (v + m - 1) // m * m


def _vmem_need_bytes(tile_m, d, io_item, mm_item):
    act = 2 * tile_m * d * (2 * io_item)      # x + out tiles, double-buffered
    wts = 2 * d * d * mm_item                 # w1 + w2, single-buffered (Buffered(1))
    vec = 8 * d * 4                           # packed bias / LN vectors
    f32_tmp = 3 * tile_m * d * 4              # live f32 h / LN temporaries headroom
    return act + wts + vec + f32_tmp


def resblock_forward(x, params, *, target_tile_m=512, mm_dtype=jnp.bfloat16):
    """x: (N, D). params: fc1/fc2/norm1/norm2 parameters in PyTorch layout."""
    N, D = x.shape
    io_item = jnp.dtype(x.dtype).itemsize
    mm_item = jnp.dtype(mm_dtype).itemsize

    # VMEM budget from the actual chip (v7x: 64 MiB/core, v5e/v6e: 128 MiB), headroom kept.
    try:
        vmem_cap = int(pltpu.get_tpu_info().vmem_capacity_bytes)
    except Exception:
        vmem_cap = 64 * 1024 * 1024
    budget = int(0.80 * vmem_cap)

    # Row tile: large enough to feed the MXU / amortize per-step overhead, but
    #  - >= 2 grid steps when N >= 16 (v7x has 2 TensorCores; the "parallel" axis
    #    is sharded across them),
    #  - sized so ragged waste is <= ~7 rows per step (no jnp.pad of x),
    #  - shrunk if the VMEM estimate exceeds the budget.
    n_steps = pl.cdiv(N, target_tile_m)
    if N >= 16:
        n_steps = max(n_steps, 2)
    tile_m = max(8, _round_up(pl.cdiv(N, n_steps), 8))
    while _vmem_need_bytes(tile_m, D, io_item, mm_item) > budget and tile_m > 8:
        tile_m = max(8, _round_up(tile_m // 2, 8))
    # TODO(synk): for very large D where the two (D, D) weights alone blow the VMEM
    # budget (v7x f32 D >~ 1700), add a second "arbitrary" grid axis streaming
    # (D, tn) weight column tiles; not needed for the dims this module uses.
    grid_m = pl.cdiv(N, tile_m)
    rows_eff = grid_m * tile_m

    w1 = params["w1"].T.astype(mm_dtype)      # (D_in, D_out)
    w2 = params["w2"].T.astype(mm_dtype)
    zero = jnp.zeros((D,), jnp.float32)
    vecs = jnp.stack([params["b1"], params["g1"], params["be1"],
                      params["b2"], params["g2"], params["be2"],
                      zero, zero], axis=0).astype(jnp.float32)   # (8, D)

    row_spec = pl.BlockSpec((tile_m, D), lambda i: (i, 0))
    # Grid-invariant operands: copied once; single-buffered (double-buffering buys nothing).
    w_spec = pl.BlockSpec((D, D), lambda i: (0, 0), pipeline_mode=pl.Buffered(1))
    vec_spec = pl.BlockSpec((8, D), lambda i: (0, 0), pipeline_mode=pl.Buffered(1))

    vmem_limit = int(min(budget,
                         max(2 * _vmem_need_bytes(tile_m, D, io_item, mm_item),
                             8 * 1024 * 1024)))

    cost = pl.CostEstimate(
        flops=4 * rows_eff * D * D,            # two (rows, D) @ (D, D) matmuls
        transcendentals=2 * rows_eff,          # one rsqrt per row per LayerNorm
        bytes_accessed=2 * rows_eff * D * io_item + 2 * D * D * mm_item + 8 * D * 4,
    )

    return pl.pallas_call(
        resblock_kernel,
        out_shape=jax.ShapeDtypeStruct((N, D), x.dtype),
        grid_spec=pltpu.PrefetchScalarGridSpec(
            num_scalar_prefetch=0,
            grid=(grid_m,),
            in_specs=[row_spec, w_spec, w_spec, vec_spec],
            out_specs=row_spec,
        ),
        compiler_params=pltpu.CompilerParams(
            dimension_semantics=("parallel",),
            vmem_limit_bytes=vmem_limit,
        ),
        cost_estimate=cost,
    )(x, w1, w2, vecs)


def resblock_reference(x, params):
    x = x.astype(jnp.float32)

    def ln(v, g, b):
        mu = jnp.mean(v, axis=-1, keepdims=True)
        var = jnp.mean((v - mu) ** 2, axis=-1, keepdims=True)
        return (v - mu) / jnp.sqrt(var + EPS) * g + b

    h = x @ params["w1"].T + params["b1"]
    h = _leaky_relu(ln(h, params["g1"], params["be1"]))
    out = h @ params["w2"].T + params["b2"]
    out = ln(out, params["g2"], params["be2"])
    return _leaky_relu(out + x)


if __name__ == "__main__":
    # Small shapes consistent with the module: batch=2, seq=8, dim=128 -> N=16 rows.
    batch, seq, dim = 2, 8, 128
    key = jax.random.PRNGKey(0)
    kx, k1, k2, k3, k4 = jax.random.split(key, 5)

    x = jax.random.normal(kx, (batch * seq, dim), dtype=jnp.float32)

    bound = 1.0 / float(dim) ** 0.5
    params = {
        # nn.Linear(dim, dim): weight (out, in), bias (out,)
        "w1": jax.random.uniform(k1, (dim, dim), jnp.float32, -bound, bound),
        "b1": jax.random.uniform(k2, (dim,), jnp.float32, -bound, bound),
        "w2": jax.random.uniform(k3, (dim, dim), jnp.float32, -bound, bound),
        "b2": jax.random.uniform(k4, (dim,), jnp.float32, -bound, bound),
        # nn.LayerNorm(dim): weight=1, bias=0 at init
        "g1": jnp.ones((dim,), jnp.float32),
        "be1": jnp.zeros((dim,), jnp.float32),
        "g2": jnp.ones((dim,), jnp.float32),
        "be2": jnp.zeros((dim,), jnp.float32),
    }

    ref = resblock_reference(x, params)

    # 1) f32 MXU operands, f32 I/O: tight parity with the f32 reference.
    out_f32 = jax.block_until_ready(resblock_forward(x, params, mm_dtype=jnp.float32))
    assert out_f32.shape == (batch * seq, dim)
    assert jnp.allclose(out_f32, ref, atol=1e-4, rtol=1e-4), "f32 kernel mismatch"

    # 2) default bf16 MXU operands (fast path on v5e/v6e/v7x), f32 I/O + f32 LN/residual.
    out_bf16w = jax.block_until_ready(resblock_forward(x, params))
    assert jnp.allclose(out_bf16w, ref, atol=1e-1, rtol=1e-1), "bf16-matmul mismatch"

    # 3) bf16 activation I/O (HBM-bound regime at small D): LN / residual still f32 inside.
    out_bf16io = jax.block_until_ready(resblock_forward(x.astype(jnp.bfloat16), params))
    assert out_bf16io.dtype == jnp.bfloat16
    assert jnp.allclose(out_bf16io.astype(jnp.float32), ref, atol=2e-1, rtol=2e-1), \
        "bf16-io kernel mismatch"

    # 4) ragged N (not a multiple of 8 / tile_m): no jnp.pad, masked last-block stores.
    x_odd = x[:13]
    out_odd = jax.block_until_ready(resblock_forward(x_odd, params, mm_dtype=jnp.float32))
    assert out_odd.shape == (13, dim)
    assert jnp.allclose(out_odd, ref[:13], atol=1e-4, rtol=1e-4), "ragged-N mismatch"

    print("KERNEL_OK")
</pallas_src>

<mosaic_0001>
module attributes {stable_mosaic.version = 11 : i64} {
  func.func @resblock_kernel(%arg0: i32, %arg1: memref<8x128xf32, #tpu.memory_space<vmem>>, %arg2: memref<128x128xf32, #tpu.memory_space<vmem>>, %arg3: memref<128x128xf32, #tpu.memory_space<vmem>>, %arg4: memref<8x128xf32, #tpu.memory_space<vmem>>, %arg5: memref<8x128xf32, #tpu.memory_space<vmem>>) attributes {dimension_semantics = [#tpu.dimension_semantics<parallel>], iteration_bounds = array<i64: 2>, scalar_prefetch = 0 : i64, scratch_operands = 0 : i64, tpu.core_type = #tpu.core_type<tc>, window_params = [{transform_indices = @transform_0, window_bounds = array<i64: 8, 128>}, {pipeline_mode = #tpu.pipeline_mode<synchronous>, transform_indices = @transform_1, window_bounds = array<i64: 128, 128>}, {pipeline_mode = #tpu.pipeline_mode<synchronous>, transform_indices = @transform_2, window_bounds = array<i64: 128, 128>}, {pipeline_mode = #tpu.pipeline_mode<synchronous>, transform_indices = @transform_3, window_bounds = array<i64: 8, 128>}, {transform_indices = @transform_4, window_bounds = array<i64: 8, 128>}]} {
    %c0 = arith.constant 0 : index
    %c0_0 = arith.constant 0 : index
    %0 = vector.load %arg1[%c0, %c0_0] : memref<8x128xf32, #tpu.memory_space<vmem>>, vector<8x128xf32>
    %c0_1 = arith.constant 0 : index
    %c0_2 = arith.constant 0 : index
    %1 = vector.load %arg4[%c0_1, %c0_2] : memref<8x128xf32, #tpu.memory_space<vmem>>, vector<8x128xf32>
    %2 = vector.extract_strided_slice %1 {offsets = [0, 0], sizes = [1, 128], strides = [1, 1]} : vector<8x128xf32> to vector<1x128xf32>
    %3 = vector.extract_strided_slice %1 {offsets = [1, 0], sizes = [1, 128], strides = [1, 1]} : vector<8x128xf32> to vector<1x128xf32>
    %4 = vector.extract_strided_slice %1 {offsets = [2, 0], sizes = [1, 128], strides = [1, 1]} : vector<8x128xf32> to vector<1x128xf32>
    %5 = vector.extract_strided_slice %1 {offsets = [3, 0], sizes = [1, 128], strides = [1, 1]} : vector<8x128xf32> to vector<1x128xf32>
    %6 = vector.extract_strided_slice %1 {offsets = [4, 0], sizes = [1, 128], strides = [1, 1]} : vector<8x128xf32> to vector<1x128xf32>
    %7 = vector.extract_strided_slice %1 {offsets = [5, 0], sizes = [1, 128], strides = [1, 1]} : vector<8x128xf32> to vector<1x128xf32>
    %c0_3 = arith.constant 0 : index
    %c0_4 = arith.constant 0 : index
    %8 = vector.load %arg2[%c0_3, %c0_4] : memref<128x128xf32, #tpu.memory_space<vmem>>, vector<128x128xf32>
    %cst = arith.constant dense<0.000000e+00> : vector<8x128xf32>
    %9 = tpu.matmul %0, %8, %cst {dimension_numbers = #tpu.dot_dimension_numbers<[1], [0], [0], [1], [0, 0, 1, 1], [], []>} : vector<8x128xf32>, vector<128x128xf32>, vector<8x128xf32> -> vector<8x128xf32>
    %10 = vector.broadcast %2 : vector<1x128xf32> to vector<8x128xf32>
    %11 = arith.addf %9, %10 : vector<8x128xf32>
    %cst_5 = arith.constant dense<0.000000e+00> : vector<8xf32>
    %12 = vector.multi_reduction <add>, %11, %cst_5 [1] : vector<8x128xf32> to vector<8xf32>
    %13 = vector.shape_cast %12 : vector<8xf32> to vector<8x1xf32>
    %cst_6 = arith.constant 1.280000e+02 : f32
    %14 = vector.broadcast %cst_6 : f32 to vector<8x1xf32>
    %15 = arith.divf %13, %14 : vector<8x1xf32>
    %16 = vector.broadcast %15 : vector<8x1xf32> to vector<8x128xf32>
    %17 = arith.subf %11, %16 : vector<8x128xf32>
    %18 = arith.mulf %17, %17 : vector<8x128xf32>
    %cst_7 = arith.constant dense<0.000000e+00> : vector<8xf32>
    %19 = vector.multi_reduction <add>, %18, %cst_7 [1] : vector<8x128xf32> to vector<8xf32>
    %20 = vector.shape_cast %19 : vector<8xf32> to vector<8x1xf32>
    %cst_8 = arith.constant 1.280000e+02 : f32
    %21 = vector.broadcast %cst_8 : f32 to vector<8x1xf32>
    %22 = arith.divf %20, %21 : vector<8x1xf32>
    %cst_9 = arith.constant 9.99999974E-6 : f32
    %23 = vector.broadcast %cst_9 : f32 to vector<8x1xf32>
    %24 = arith.addf %22, %23 : vector<8x1xf32>
    %25 = math.rsqrt %24 : vector<8x1xf32>
    %26 = vector.broadcast %25 : vector<8x1xf32> to vector<8x128xf32>
    %27 = arith.mulf %17, %26 : vector<8x128xf32>
    %28 = vector.broadcast %3 : vector<1x128xf32> to vector<8x128xf32>
    %29 = arith.mulf %27, %28 : vector<8x128xf32>
    %30 = vector.broadcast %4 : vector<1x128xf32> to vector<8x128xf32>
    %31 = arith.addf %29, %30 : vector<8x128xf32>
    %cst_10 = arith.constant 0.000000e+00 : f32
    %32 = vector.broadcast %cst_10 : f32 to vector<8x128xf32>
    %33 = arith.cmpf oge, %31, %32 : vector<8x128xf32>
    %cst_11 = arith.constant 1.000000e-01 : f32
    %34 = vector.broadcast %cst_11 : f32 to vector<8x128xf32>
    %35 = arith.mulf %34, %31 : vector<8x128xf32>
    %36 = arith.select %33, %31, %35 : vector<8x128xi1>, vector<8x128xf32>
    %c0_12 = arith.constant 0 : index
    %c0_13 = arith.constant 0 : index
    %37 = vector.load %arg3[%c0_12, %c0_13] : memref<128x128xf32, #tpu.memory_space<vmem>>, vector<128x128xf32>
    %cst_14 = arith.constant dense<0.000000e+00> : vector<8x128xf32>
    %38 = tpu.matmul %36, %37, %cst_14 {dimension_numbers = #tpu.dot_dimension_numbers<[1], [0], [0], [1], [0, 0, 1, 1], [], []>} : vector<8x128xf32>, vector<128x128xf32>, vector<8x128xf32> -> vector<8x128xf32>
    %39 = vector.broadcast %5 : vector<1x128xf32> to vector<8x128xf32>
    %40 = arith.addf %38, %39 : vector<8x128xf32>
    %cst_15 = arith.constant dense<0.000000e+00> : vector<8xf32>
    %41 = vector.multi_reduction <add>, %40, %cst_15 [1] : vector<8x128xf32> to vector<8xf32>
    %42 = vector.shape_cast %41 : vector<8xf32> to vector<8x1xf32>
    %cst_16 = arith.constant 1.280000e+02 : f32
    %43 = vector.broadcast %cst_16 : f32 to vector<8x1xf32>
    %44 = arith.divf %42, %43 : vector<8x1xf32>
    %45 = vector.broadcast %44 : vector<8x1xf32> to vector<8x128xf32>
    %46 = arith.subf %40, %45 : vector<8x128xf32>
    %47 = arith.mulf %46, %46 : vector<8x128xf32>
    %cst_17 = arith.constant dense<0.000000e+00> : vector<8xf32>
    %48 = vector.multi_reduction <add>, %47, %cst_17 [1] : vector<8x128xf32> to vector<8xf32>
    %49 = vector.shape_cast %48 : vector<8xf32> to vector<8x1xf32>
    %cst_18 = arith.constant 1.280000e+02 : f32
    %50 = vector.broadcast %cst_18 : f32 to vector<8x1xf32>
    %51 = arith.divf %49, %50 : vector<8x1xf32>
    %cst_19 = arith.constant 9.99999974E-6 : f32
    %52 = vector.broadcast %cst_19 : f32 to vector<8x1xf32>
    %53 = arith.addf %51, %52 : vector<8x1xf32>
    %54 = math.rsqrt %53 : vector<8x1xf32>
    %55 = vector.broadcast %54 : vector<8x1xf32> to vector<8x128xf32>
    %56 = arith.mulf %46, %55 : vector<8x128xf32>
    %57 = vector.broadcast %6 : vector<1x128xf32> to vector<8x128xf32>
    %58 = arith.mulf %56, %57 : vector<8x128xf32>
    %59 = vector.broadcast %7 : vector<1x128xf32> to vector<8x128xf32>
    %60 = arith.addf %58, %59 : vector<8x128xf32>
    %61 = arith.addf %60, %0 : vector<8x128xf32>
    %cst_20 = arith.constant 0.000000e+00 : f32
    %62 = vector.broadcast %cst_20 : f32 to vector<8x128xf32>
    %63 = arith.cmpf oge, %61, %62 : vector<8x128xf32>
    %cst_21 = arith.constant 1.000000e-01 : f32
    %64 = vector.broadcast %cst_21 : f32 to vector<8x128xf32>
    %65 = arith.mulf %64, %61 : vector<8x128xf32>
    %66 = arith.select %63, %61, %65 : vector<8x128xi1>, vector<8x128xf32>
    %c0_22 = arith.constant 0 : index
    %c0_23 = arith.constant 0 : index
    %67 = vector.load %arg5[%c0_22, %c0_23] : memref<8x128xf32, #tpu.memory_space<vmem>>, vector<8x128xf32>
    tpu.vector_store %arg5[%c0_22, %c0_23], %66 {strides = array<i32>} : memref<8x128xf32, #tpu.memory_space<vmem>>, vector<8x128xf32>,
    return
  }
  func.func @transform_0(%arg0: i32) -> (i32, i32) {
    %c0_i32 = arith.constant 0 : i32
    %c0_i32_0 = arith.constant 0 : i32
    return %arg0, %c0_i32 : i32, i32
  }
  func.func @transform_1(%arg0: i32) -> (i32, i32) {
    %c0_i32 = arith.constant 0 : i32
    %c0_i32_0 = arith.constant 0 : i32
    %c0_i32_1 = arith.constant 0 : i32
    return %c0_i32, %c0_i32_0 : i32, i32
  }
  func.func @transform_2(%arg0: i32) -> (i32, i32) {
    %c0_i32 = arith.constant 0 : i32
    %c0_i32_0 = arith.constant 0 : i32
    %c0_i32_1 = arith.constant 0 : i32
    return %c0_i32, %c0_i32_0 : i32, i32
  }
  func.func @transform_3(%arg0: i32) -> (i32, i32) {
    %c0_i32 = arith.constant 0 : i32
    %c0_i32_0 = arith.constant 0 : i32
    %c0_i32_1 = arith.constant 0 : i32
    return %c0_i32, %c0_i32_0 : i32, i32
  }
  func.func @transform_4(%arg0: i32) -> (i32, i32) {
    %c0_i32 = arith.constant 0 : i32
    %c0_i32_0 = arith.constant 0 : i32
    return %arg0, %c0_i32 : i32, i32
  }
}

</mosaic_0001>

<llo_original>
// kernel: tpu_custom_call.1
$region0: #{tpu_custom_call.1}
  #allocation0 [shape = 'u32[]', space=smem, size = 0x4, offset = 0x4, fixed_abs, tag = 'smem constant byte address 0x4 - core index']
  #allocation1 [shape = 'u32[144,128]{1,0:T(1,128)}', space=vmem, size = 0x12000, scoped, tag = 'internal scratch']
  %s0 = inlined_call_operand.hbm [shape: f32[16,128], index: 0, kind: input, shape index: {}]
  %s1 = inlined_call_operand.hbm [shape: f32[128,128], index: 1, kind: input, shape index: {}]
  %s2 = inlined_call_operand.hbm [shape: f32[128,128], index: 2, kind: input, shape index: {}]
  %s3 = inlined_call_operand.vmem [shape: f32[8,128], index: 3, kind: input, shape index: {}]
  %s4 = inlined_call_operand.hbm [shape: f32[16,128], index: 4, kind: output, shape index: {}]
  %s5 = sld [smem:[#allocation0]]
  $region61: #{tpu_custom_call.1} parent=0
    _
  %s7 = ssub.s32 1, %s5
  %s8 = scalar_select 0, %s7, %s5
  $region1: #{tpu_custom_call.1} parent=0
    #allocation2 [shape = 'u8[8192]{0}', space=vmem, size = 0x2000, scoped, tag = 'input window, operand 0']
    #allocation3 [shape = 's32[2]{0}', space=sflag, size = 0x8, scoped, tag = 'scoped memory for tpu_custom_call.1']
    #allocation4 [shape = 's32[2]{0}', space=sflag, size = 0x8, scoped, tag = 'scoped memory for tpu_custom_call.1']
    #allocation5 [shape = 'u8[65536]{0}', space=vmem, size = 0x10000, scoped, tag = 'input window, operand 1, single buffered']
    #allocation6 [shape = 's32[1]{0}', space=sflag, size = 0x4, scoped, tag = 'scoped memory for tpu_custom_call.1']
    #allocation7 [shape = 'u8[65536]{0}', space=vmem, size = 0x10000, scoped, tag = 'input window, operand 2, single buffered']
    #allocation8 [shape = 'u8[8192]{0}', space=vmem, size = 0x2000, scoped, tag = 'output window, operand 0']
    %9 = vsyncpa [#allocation3], 0
    %s10 = scalar_lea.sflag [#allocation3], 1
    %11 = vsyncpa %s10, 0
    %12 = vsyncpa [#allocation6], 0
    %13 = vsyncpa [#allocation4], 0
    %s14 = scalar_lea.sflag [#allocation4], 1
    %15 = vsyncpa %s14, 0
    loop: start=0, step=1, limit=4
    $region2: #{tpu_custom_call.1} parent=1 // loop_pre_header
      _
    $region3: #{tpu_custom_call.1} parent=1 // loop_header
      %s17 = sphi 0, %s21
      %p18 = scmp.ge.s32.totalorder %s17, 4
      %s27 = sphi 0, %s29
      %s30 = sphi 0, %s27
      %s31 = sphi 0, %s30
      %s47 = sphi 0, %s31
      %s51 = sphi 0, %s51
      %s53 = sphi 0, %s51
      %s54 = sphi 0, %s53
      %s68 = sphi 0, %s54
      %s72 = sphi 0, %s72
      %s74 = sphi 0, %s72
      %s75 = sphi 0, %s74
      %s89 = sphi 0, %s75
      %s93 = sphi 0, %s93
      %s95 = sphi 0, %s93
      %s96 = sphi 0, %s95
      %s110 = sphi 0, %s96
      %s116 = sphi 0, %s118
      %s119 = sphi 0, %s116
      %s120 = sphi 0, %s119
      %s136 = sphi 0, %s120
    $region4: #{tpu_custom_call.1} parent=1 // loop_header_branch
      %20 = sbr.rel (%p18) target = $region8
    $region5: #{tpu_custom_call.1} parent=1 // loop_body
      %s22 = ssub.s32 %s17, 1
      %s23 = ssub.s32 %s17, 2
      %s24 = sadd.s32 %s17, 1
      %s25 = ssub.s32 %s17, %s24
      %p26 = scmp.eq.s32.totalorder %s25, 0
      %s28 = sadd.s32 %s27, 1
      %s29 = scalar_select %p26, %s27, %s28
      %p32 = pneg %p26
      %p33 = scmp.eq.s32.totalorder %s17, 1
      %p34 = por %p32, %p33
      %p35 = scmp.ne.s32.totalorder %s27, %s30
      %p36 = scmp.eq.s32.totalorder %s17, 0
      %p37 = por %p35, %p36
      %p38 = scmp.ne.s32.totalorder %s27, %s30
      %p39 = scmp.eq.s32.totalorder %s22, 1
      %p40 = por %p38, %p39
      %p41 = scmp.ne.s32.totalorder %s30, %s31
      %p42 = scmp.eq.s32.totalorder %s22, 0
      %p43 = por %p41, %p42
      %p44 = scmp.ne.s32.totalorder %s30, %s31
      %p45 = scmp.eq.s32.totalorder %s23, 1
      %p46 = por %p44, %p45
      %p48 = scmp.ne.s32.totalorder %s31, %s47
      %p49 = scmp.eq.s32.totalorder %s23, 0
      %p50 = por %p48, %p49
      %s52 = sadd.s32 %s51, 1
      %p55 = scmp.eq.s32.totalorder %s17, 1
      %p56 = scmp.ne.s32.totalorder %s51, %s53
      %p57 = scmp.eq.s32.totalorder %s17, 0
      %p58 = por %p56, %p57
      %p59 = scmp.ne.s32.totalorder %s51, %s53
      %p60 = scmp.eq.s32.totalorder %s22, 1
      %p61 = por %p59, %p60
      %p62 = scmp.ne.s32.totalorder %s53, %s54
      %p63 = scmp.eq.s32.totalorder %s22, 0
      %p64 = por %p62, %p63
      %p65 = scmp.ne.s32.totalorder %s53, %s54
      %p66 = scmp.eq.s32.totalorder %s23, 1
      %p67 = por %p65, %p66
      %p69 = scmp.ne.s32.totalorder %s54, %s68
      %p70 = scmp.eq.s32.totalorder %s23, 0
      %p71 = por %p69, %p70
      %s73 = sadd.s32 %s72, 1
      %p76 = scmp.eq.s32.totalorder %s17, 1
      %p77 = scmp.ne.s32.totalorder %s72, %s74
      %p78 = scmp.eq.s32.totalorder %s17, 0
      %p79 = por %p77, %p78
      %p80 = scmp.ne.s32.totalorder %s72, %s74
      %p81 = scmp.eq.s32.totalorder %s22, 1
      %p82 = por %p80, %p81
      %p83 = scmp.ne.s32.totalorder %s74, %s75
      %p84 = scmp.eq.s32.totalorder %s22, 0
      %p85 = por %p83, %p84
      %p86 = scmp.ne.s32.totalorder %s74, %s75
      %p87 = scmp.eq.s32.totalorder %s23, 1
      %p88 = por %p86, %p87
      %p90 = scmp.ne.s32.totalorder %s75, %s89
      %p91 = scmp.eq.s32.totalorder %s23, 0
      %p92 = por %p90, %p91
      %s94 = sadd.s32 %s93, 1
      %p97 = scmp.eq.s32.totalorder %s17, 1
      %p98 = scmp.ne.s32.totalorder %s93, %s95
      %p99 = scmp.eq.s32.totalorder %s17, 0
      %p100 = por %p98, %p99
      %p101 = scmp.ne.s32.totalorder %s93, %s95
      %p102 = scmp.eq.s32.totalorder %s22, 1
      %p103 = por %p101, %p102
      %p104 = scmp.ne.s32.totalorder %s95, %s96
      %p105 = scmp.eq.s32.totalorder %s22, 0
      %p106 = por %p104, %p105
      %p107 = scmp.ne.s32.totalorder %s95, %s96
      %p108 = scmp.eq.s32.totalorder %s23, 1
      %p109 = por %p107, %p108
      %p111 = scmp.ne.s32.totalorder %s96, %s110
      %p112 = scmp.eq.s32.totalorder %s23, 0
      %p113 = por %p111, %p112
      %s114 = ssub.s32 %s17, %s24
      %p115 = scmp.eq.s32.totalorder %s114, 0
      %s117 = sadd.s32 %s116, 1
      %s118 = scalar_select %p115, %s116, %s117
      %p121 = pneg %p115
      %p122 = scmp.eq.s32.totalorder %s17, 1
      %p123 = por %p121, %p122
      %p124 = scmp.ne.s32.totalorder %s116, %s119
      %p125 = scmp.eq.s32.totalorder %s17, 0
      %p126 = por %p124, %p125
      %p127 = scmp.ne.s32.totalorder %s116, %s119
      %p128 = scmp.eq.s32.totalorder %s22, 1
      %p129 = por %p127, %p128
      %p130 = scmp.ne.s32.totalorder %s119, %s120
      %p131 = scmp.eq.s32.totalorder %s22, 0
      %p132 = por %p130, %p131
      %p133 = scmp.ne.s32.totalorder %s119, %s120
      %p134 = scmp.eq.s32.totalorder %s23, 1
      %p135 = por %p133, %p134
      %p137 = scmp.ne.s32.totalorder %s120, %s136
      %p138 = scmp.eq.s32.totalorder %s23, 0
      %p139 = por %p137, %p138
      %p140 = scmp.le.s32.totalorder 1, %s17
      %p141 = scmp.lt.s32.totalorder %s17, 3
      %p142 = pnand %p140, %p141
      %p143 = pneg %p142
      // Predicated region
      $region9: #{tpu_custom_call.1} parent=5 // pred_check
        _
      $region10: #{tpu_custom_call.1} parent=5 // pred_check_branch
        %145 = sbr.rel (%p142) target = $region12
      $region11: #{tpu_custom_call.1} parent=5 // pred_region
        %s146 = ssub.s32 %s17, 1
        // Predicated region
        $region13: #{tpu_custom_call.1} parent=11 // pred_check
          %p147 = pneg %p64
        $region14: #{tpu_custom_call.1} parent=11 // pred_check_branch
          %149 = sbr.rel (%p147) target = $region16
        $region15: #{tpu_custom_call.1} parent=11 // pred_region
          %s151 = ssub.s32 2048, 2048
          %152 = vsyncadd [#allocation6], %s151
          %s153 = sshll.u32 [#allocation5], 4
          %s154 = int_to_ptr.vmem [resolvable:$true] %s153
          %159 = dma.hbm_to_vmem [thread:$0]  %s1, 2048, %s154, [#allocation6], 128, 128, 8
        $region16: #{tpu_custom_call.1} parent=11 // pred_fallthru
          _
        // Predicated region
        $region17: #{tpu_custom_call.1} parent=11 // pred_check
          %p160 = pneg %p85
        $region18: #{tpu_custom_call.1} parent=11 // pred_check_branch
          %162 = sbr.rel (%p160) target = $region20
        $region19: #{tpu_custom_call.1} parent=11 // pred_region
          %s164 = ssub.s32 2048, 2048
          %165 = vsyncadd [#allocation6], %s164
          %s166 = sshll.u32 [#allocation7], 4
          %s167 = int_to_ptr.vmem [resolvable:$true] %s166
          %172 = dma.hbm_to_vmem [thread:$0]  %s2, 2048, %s167, [#allocation6], 128, 128, 8
        $region20: #{tpu_custom_call.1} parent=11 // pred_fallthru
          _
        // Predicated region
        $region21: #{tpu_custom_call.1} parent=11 // pred_check
          %p173 = pneg %p106
        $region22: #{tpu_custom_call.1} parent=11 // pred_check_branch
          %175 = sbr.rel (%p173) target = $region24
        $region23: #{tpu_custom_call.1} parent=11 // pred_region
          _
        $region24: #{tpu_custom_call.1} parent=11 // pred_fallthru
          _
      $region12: #{tpu_custom_call.1} parent=5 // pred_fallthru
        _
      %p176 = scmp.lt.s32.totalorder %s17, 2
      // Predicated region
      $region25: #{tpu_custom_call.1} parent=5 // pred_check
        %p177 = pneg %p176
      $region26: #{tpu_custom_call.1} parent=5 // pred_check_branch
        %179 = sbr.rel (%p177) target = $region28
      $region27: #{tpu_custom_call.1} parent=5 // pred_region
        // Predicated region
        $region29: #{tpu_custom_call.1} parent=27 // pred_check
          %p180 = pneg %p37
        $region30: #{tpu_custom_call.1} parent=27 // pred_check_branch
          %182 = sbr.rel (%p180) target = $region32
        $region31: #{tpu_custom_call.1} parent=27 // pred_region
          %s183 = sand.u32 %s27, 1
          %s184 = scalar_lea.sflag [#allocation3], %s183
          %s185 = sand.u32 %s27, 1
          %s186 = smul.addr %s185, 8
          %s187 = scalar_lea.vmem [#allocation2], %s186
          %s189 = ssub.s32 128, 128
          %190 = vsyncadd %s184, %s189
          %s191 = smul.addr %s17, 128
          %s192 = scalar_lea.hbm %s0, %s191
          %s194 = sshll.u32 %s187, 4
          %s195 = int_to_ptr.vmem [resolvable:$true] %s194
          %197 = dma.hbm_to_vmem [thread:$0]  %s192, 128, %s195, %s184
        $region32: #{tpu_custom_call.1} parent=27 // pred_fallthru
          _
      $region28: #{tpu_custom_call.1} parent=5 // pred_fallthru
        _
      %p198 = scmp.le.s32.totalorder 1, %s17
      %p199 = scmp.lt.s32.totalorder %s17, 3
      %p200 = pnand %p198, %p199
      %p201 = pneg %p200
      // Predicated region
      $region33: #{tpu_custom_call.1} parent=5 // pred_check
        _
      $region34: #{tpu_custom_call.1} parent=5 // pred_check_branch
        %203 = sbr.rel (%p200) target = $region36
      $region35: #{tpu_custom_call.1} parent=5 // pred_region
        %s204 = ssub.s32 %s17, 1
        %s205 = sand.u32 %s30, 1
        %s206 = scalar_lea.sflag [#allocation3], %s205
        %s207 = sand.u32 %s30, 1
        %s208 = smul.addr %s207, 8
        %s209 = scalar_lea.vmem [#allocation2], %s208
        // Predicated region
        $region37: #{tpu_custom_call.1} parent=35 // pred_check
          %p210 = pneg %p43
        $region38: #{tpu_custom_call.1} parent=35 // pred_check_branch
          %212 = sbr.rel (%p210) target = $region40
        $region39: #{tpu_custom_call.1} parent=35 // pred_region
          %213 = dma.done %s206, 128
        $region40: #{tpu_custom_call.1} parent=35 // pred_fallthru
          _
        // Predicated region
        $region41: #{tpu_custom_call.1} parent=35 // pred_check
          %p214 = pneg %p64
        $region42: #{tpu_custom_call.1} parent=35 // pred_check_branch
          %216 = sbr.rel (%p214) target = $region44
        $region43: #{tpu_custom_call.1} parent=35 // pred_region
          %217 = dma.done [#allocation6], 2048
        $region44: #{tpu_custom_call.1} parent=35 // pred_fallthru
          _
        // Predicated region
        $region45: #{tpu_custom_call.1} parent=35 // pred_check
          %p218 = pneg %p85
        $region46: #{tpu_custom_call.1} parent=35 // pred_check_branch
          %220 = sbr.rel (%p218) target = $region48
        $region47: #{tpu_custom_call.1} parent=35 // pred_region
          %221 = dma.done [#allocation6], 2048
        $region48: #{tpu_custom_call.1} parent=35 // pred_fallthru
          _
        %s222 = sand.u32 %s30, 1
        %s223 = scalar_lea.sflag [#allocation3], %s222
        %s224 = sand.u32 %s30, 1
        %s225 = smul.addr %s224, 8
        %s226 = scalar_lea.vmem [#allocation2], %s225
        %p227 = pneg %p43
        %p228 = pneg %p40
        %p229 = pneg %p64
        %p230 = pneg %p61
        %p231 = pneg %p85
        %p232 = pneg %p82
        %p233 = pneg %p106
        %p234 = pneg %p103
        %p235 = pneg %p132
        %p236 = pneg %p129
        %s237 = sand.u32 %s119, 1
        %s238 = scalar_lea.sflag [#allocation4], %s237
        %s239 = sand.u32 %s119, 1
        %s240 = smul.addr %s239, 8
        %s241 = scalar_lea.vmem [#allocation8], %s240
        %v242 = vld [vmem:[%s209] sm:$0xff]
        %v243 = vld [vmem:[%s3] sm:$0xff]
        %v244 = vld [vmem:[#allocation5] sm:$0xff]
        %v245 = vld [vmem:[#allocation5 + $0x8] sm:$0xff]
        %v246 = vld [vmem:[#allocation5 + $0x10] sm:$0xff]
        %v247 = vld [vmem:[#allocation5 + $0x18] sm:$0xff]
        %v248 = vld [vmem:[#allocation5 + $0x20] sm:$0xff]
        %v249 = vld [vmem:[#allocation5 + $0x28] sm:$0xff]
        %v250 = vld [vmem:[#allocation5 + $0x30] sm:$0xff]
        %v251 = vld [vmem:[#allocation5 + $0x38] sm:$0xff]
        %v252 = vld [vmem:[#allocation5 + $0x40] sm:$0xff]
        %v253 = vld [vmem:[#allocation5 + $0x48] sm:$0xff]
        %v254 = vld [vmem:[#allocation5 + $0x50] sm:$0xff]
        %v255 = vld [vmem:[#allocation5 + $0x58] sm:$0xff]
        %v256 = vld [vmem:[#allocation5 + $0x60] sm:$0xff]
        %v257 = vld [vmem:[#allocation5 + $0x68] sm:$0xff]
        %v258 = vld [vmem:[#allocation5 + $0x70] sm:$0xff]
        %v259 = vld [vmem:[#allocation5 + $0x78] sm:$0xff]
        %v260 = vlaneseq
        %v261 = vshrl.u32 %v260, 7
        %v262 = vsub.s32 0, %v261
        %v263 = vrot.slane %v243, %v262
        %264 = vmatprep.subr.mxu0 0.0
        %265 = vmatpush1.msra.mxu0 %v244
        %266 = vmatprep.subr.mxu0 0.0
        %267 = vmatpush1.msra.mxu0 %v245
        %268 = vmatprep.subr.mxu0 0.0
        %269 = vmatpush1.msra.mxu0 %v246
        %270 = vmatprep.subr.mxu0 0.0
        %271 = vmatpush1.msra.mxu0 %v247
        %272 = vmatprep.subr.mxu0 0.0
        %273 = vmatpush1.msra.mxu0 %v248
        %274 = vmatprep.subr.mxu0 0.0
        %275 = vmatpush1.msra.mxu0 %v249
        %276 = vmatprep.subr.mxu0 0.0
        %277 = vmatpush1.msra.mxu0 %v250
        %278 = vmatprep.subr.mxu0 0.0
        %279 = vmatpush1.msra.mxu0 %v251
        %280 = vmatprep.subr.mxu0 0.0
        %281 = vmatpush1.msra.mxu0 %v252
        %282 = vmatprep.subr.mxu0 0.0
        %283 = vmatpush1.msra.mxu0 %v253
        %284 = vmatprep.subr.mxu0 0.0
        %285 = vmatpush1.msra.mxu0 %v254
        %286 = vmatprep.subr.mxu0 0.0
        %287 = vmatpush1.msra.mxu0 %v255
        %288 = vmatprep.subr.mxu0 0.0
        %289 = vmatpush1.msra.mxu0 %v256
        %290 = vmatprep.subr.mxu0 0.0
        %291 = vmatpush1.msra.mxu0 %v257
        %292 = vmatprep.subr.mxu0 0.0
        %293 = vmatpush1.msra.mxu0 %v258
        %294 = vmatprep.subr.mxu0 0.0
        %295 = vmatpush1.msra.mxu0 %v259
        %296 = vmatprep.subr.mxu0 0.0
        %297 = vmatpush1.msra.mxu0 0.0
        %298 = vmatprep.subr.mxu0 0.0
        %299 = vmatpush1.msra.mxu0 0.0
        %300 = vmatprep.subr.mxu0 0.0
        %301 = vmatpush1.msra.mxu0 0.0
        %302 = vmatprep.subr.mxu0 0.0
        %303 = vmatpush1.msra.mxu0 0.0
        %304 = vmatprep.subr.mxu0 0.0
        %305 = vmatpush1.msra.mxu0 0.0
        %306 = vmatprep.subr.mxu0 0.0
        %307 = vmatpush1.msra.mxu0 0.0
        %308 = vmatprep.subr.mxu0 0.0
        %309 = vmatpush1.msra.mxu0 0.0
        %310 = vmatprep.subr.mxu0 0.0
        %311 = vmatpush1.msra.mxu0 0.0
        %312 = vmatprep.subr.mxu0 0.0
        %313 = vmatpush1.msra.mxu0 0.0
        %314 = vmatprep.subr.mxu0 0.0
        %315 = vmatpush1.msra.mxu0 0.0
        %316 = vmatprep.subr.mxu0 0.0
        %317 = vmatpush1.msra.mxu0 0.0
        %318 = vmatprep.subr.mxu0 0.0
        %319 = vmatpush1.msra.mxu0 0.0
        %320 = vmatprep.subr.mxu0 0.0
        %321 = vmatpush1.msra.mxu0 0.0
        %322 = vmatprep.subr.mxu0 0.0
        %323 = vmatpush1.msra.mxu0 0.0
        %324 = vmatprep.subr.mxu0 0.0
        %325 = vmatpush1.msra.mxu0 0.0
        %326 = vmatprep.subr.mxu0 0.0
        %327 = vmatpush1.msra.mxu0 0.0
        %328 = vmatprep.mubr.f32.mxu0 0.0
        %329 = vmatmul.mubr.f32.gmra.mrb[0].mxu0 %v242
        %v330 = vpop.f32.mrb[0].mxu0
        %v331 = vadd.f32 %v263, %v330
        %v332 = vpop.f32.mrb[0].mxu0
        %333 = vdwg.mxu0
        %334 = vadd.xlane.f32.xlu0 %v331
        %v335 = vpop.xlane.xlu0 %334
        %v336 = vrcp.pop 128.0
        %v337 = vmul.f32 %v335, %v336
        %v338 = vsub.f32 %v331, %v337
        %v339 = vmul.f32 %v338, %v338
        %340 = vadd.xlane.f32.xlu0 %v339
        %v341 = vpop.xlane.xlu0 %340
        %v342 = vmul.f32 %v341, %v336
        %v343 = vadd.f32 %v342, 1e-05
        %v344 = vrsqrt.pop %v343
        %v345 = vmul.f32 %v338, %v344
        %v346 = vlaneseq
        %v347 = vshrl.u32 %v346, 7
        %v348 = vsub.s32 1, %v347
        %v349 = vrot.slane %v243, %v348
        %v350 = vmul.f32 %v345, %v349
        %v351 = vlaneseq
        %v352 = vshrl.u32 %v351, 7
        %v353 = vsub.s32 2, %v352
        %v354 = vrot.slane %v243, %v353
        %v355 = vadd.f32 %v350, %v354
        %vm356 = vcmp.ge.f32.partialorder %v355, 0.0
        %v357 = vmul.f32 %v355, 0.1
        %v358 = vsel %vm356, %v355, %v357
        %v359 = vld [vmem:[#allocation7] sm:$0xff]
        %v360 = vld [vmem:[#allocation7 + $0x8] sm:$0xff]
        %v361 = vld [vmem:[#allocation7 + $0x10] sm:$0xff]
        %v362 = vld [vmem:[#allocation7 + $0x18] sm:$0xff]
        %v363 = vld [vmem:[#allocation7 + $0x20] sm:$0xff]
        %v364 = vld [vmem:[#allocation7 + $0x28] sm:$0xff]
        %v365 = vld [vmem:[#allocation7 + $0x30] sm:$0xff]
        %v366 = vld [vmem:[#allocation7 + $0x38] sm:$0xff]
        %v367 = vld [vmem:[#allocation7 + $0x40] sm:$0xff]
        %v368 = vld [vmem:[#allocation7 + $0x48] sm:$0xff]
        %v369 = vld [vmem:[#allocation7 + $0x50] sm:$0xff]
        %v370 = vld [vmem:[#allocation7 + $0x58] sm:$0xff]
        %v371 = vld [vmem:[#allocation7 + $0x60] sm:$0xff]
        %v372 = vld [vmem:[#allocation7 + $0x68] sm:$0xff]
        %v373 = vld [vmem:[#allocation7 + $0x70] sm:$0xff]
        %v374 = vld [vmem:[#allocation7 + $0x78] sm:$0xff]
        %v375 = vlaneseq
        %v376 = vshrl.u32 %v375, 7
        %v377 = vsub.s32 3, %v376
        %v378 = vrot.slane %v243, %v377
        %379 = vmatprep.subr.mxu0 0.0
        %380 = vmatpush1.msra.mxu0 %v359
        %381 = vmatprep.subr.mxu0 0.0
        %382 = vmatpush1.msra.mxu0 %v360
        %383 = vmatprep.subr.mxu0 0.0
        %384 = vmatpush1.msra.mxu0 %v361
        %385 = vmatprep.subr.mxu0 0.0
        %386 = vmatpush1.msra.mxu0 %v362
        %387 = vmatprep.subr.mxu0 0.0
        %388 = vmatpush1.msra.mxu0 %v363
        %389 = vmatprep.subr.mxu0 0.0
        %390 = vmatpush1.msra.mxu0 %v364
        %391 = vmatprep.subr.mxu0 0.0
        %392 = vmatpush1.msra.mxu0 %v365
        %393 = vmatprep.subr.mxu0 0.0
        %394 = vmatpush1.msra.mxu0 %v366
        %395 = vmatprep.subr.mxu0 0.0
        %396 = vmatpush1.msra.mxu0 %v367
        %397 = vmatprep.subr.mxu0 0.0
        %398 = vmatpush1.msra.mxu0 %v368
        %399 = vmatprep.subr.mxu0 0.0
        %400 = vmatpush1.msra.mxu0 %v369
        %401 = vmatprep.subr.mxu0 0.0
        %402 = vmatpush1.msra.mxu0 %v370
        %403 = vmatprep.subr.mxu0 0.0
        %404 = vmatpush1.msra.mxu0 %v371
        %405 = vmatprep.subr.mxu0 0.0
        %406 = vmatpush1.msra.mxu0 %v372
        %407 = vmatprep.subr.mxu0 0.0
        %408 = vmatpush1.msra.mxu0 %v373
        %409 = vmatprep.subr.mxu0 0.0
        %410 = vmatpush1.msra.mxu0 %v374
        %411 = vmatprep.subr.mxu0 0.0
        %412 = vmatpush1.msra.mxu0 0.0
        %413 = vmatprep.subr.mxu0 0.0
        %414 = vmatpush1.msra.mxu0 0.0
        %415 = vmatprep.subr.mxu0 0.0
        %416 = vmatpush1.msra.mxu0 0.0
        %417 = vmatprep.subr.mxu0 0.0
        %418 = vmatpush1.msra.mxu0 0.0
        %419 = vmatprep.subr.mxu0 0.0
        %420 = vmatpush1.msra.mxu0 0.0
        %421 = vmatprep.subr.mxu0 0.0
        %422 = vmatpush1.msra.mxu0 0.0
        %423 = vmatprep.subr.mxu0 0.0
        %424 = vmatpush1.msra.mxu0 0.0
        %425 = vmatprep.subr.mxu0 0.0
        %426 = vmatpush1.msra.mxu0 0.0
        %427 = vmatprep.subr.mxu0 0.0
        %428 = vmatpush1.msra.mxu0 0.0
        %429 = vmatprep.subr.mxu0 0.0
        %430 = vmatpush1.msra.mxu0 0.0
        %431 = vmatprep.subr.mxu0 0.0
        %432 = vmatpush1.msra.mxu0 0.0
        %433 = vmatprep.subr.mxu0 0.0
        %434 = vmatpush1.msra.mxu0 0.0
        %435 = vmatprep.subr.mxu0 0.0
        %436 = vmatpush1.msra.mxu0 0.0
        %437 = vmatprep.subr.mxu0 0.0
        %438 = vmatpush1.msra.mxu0 0.0
        %439 = vmatprep.subr.mxu0 0.0
        %440 = vmatpush1.msra.mxu0 0.0
        %441 = vmatprep.subr.mxu0 0.0
        %442 = vmatpush1.msra.mxu0 0.0
        %443 = vmatprep.mubr.f32.mxu0 0.0
        %444 = vmatmul.mubr.f32.gmra.mrb[0].mxu0 %v358
        %v445 = vpop.f32.mrb[0].mxu0
        %v446 = vadd.f32 %v378, %v445
        %v447 = vpop.f32.mrb[0].mxu0
        %448 = vdwg.mxu0
        %449 = vadd.xlane.f32.xlu0 %v446
        %v450 = vpop.xlane.xlu0 %449
        %v451 = vmul.f32 %v450, %v336
        %v452 = vsub.f32 %v446, %v451
        %v453 = vmul.f32 %v452, %v452
        %454 = vadd.xlane.f32.xlu0 %v453
        %v455 = vpop.xlane.xlu0 %454
        %v456 = vmul.f32 %v455, %v336
        %v457 = vadd.f32 %v456, 1e-05
        %v458 = vrsqrt.pop %v457
        %v459 = vmul.f32 %v452, %v458
        %v460 = vlaneseq
        %v461 = vshrl.u32 %v460, 7
        %v462 = vsub.s32 4, %v461
        %v463 = vrot.slane %v243, %v462
        %v464 = vmul.f32 %v459, %v463
        %v465 = vlaneseq
        %v466 = vshrl.u32 %v465, 7
        %v467 = vsub.s32 5, %v466
        %v468 = vrot.slane %v243, %v467
        %v469 = vadd.f32 %v464, %v468
        %v470 = vadd.f32 %v469, %v242
        %vm471 = vcmp.ge.f32.partialorder %v470, 0.0
        %v472 = vmul.f32 %v470, 0.1
        %v473 = vsel %vm471, %v470, %v472
        %474 = vst [vmem:[%s241] sm:$0xff] %v473
        %s475 = sand.u32 %s119, 1
        %s476 = scalar_lea.sflag [#allocation4], %s475
        %s477 = sand.u32 %s119, 1
        %s478 = smul.addr %s477, 8
        %s479 = scalar_lea.vmem [#allocation8], %s478
        // Predicated region
        $region49: #{tpu_custom_call.1} parent=35 // pred_check
          %p480 = pneg %p129
        $region50: #{tpu_custom_call.1} parent=35 // pred_check_branch
          %482 = sbr.rel (%p480) target = $region52
        $region51: #{tpu_custom_call.1} parent=35 // pred_region
          %s484 = ssub.s32 128, 128
          %485 = vsyncadd %s476, %s484
          %s486 = smul.addr %s22, 128
          %s487 = scalar_lea.hbm %s4, %s486
          %s489 = sshll.u32 %s479, 4
          %s490 = int_to_ptr.vmem [resolvable:$true] %s489
          %492 = dma.vmem_to_hbm [thread:$0]  %s490, 128, %s487, %s476
        $region52: #{tpu_custom_call.1} parent=35 // pred_fallthru
          _
      $region36: #{tpu_custom_call.1} parent=5 // pred_fallthru
        _
      %p493 = scmp.le.s32.totalorder 2, %s17
      // Predicated region
      $region53: #{tpu_custom_call.1} parent=5 // pred_check
        %p494 = pneg %p493
      $region54: #{tpu_custom_call.1} parent=5 // pred_check_branch
        %496 = sbr.rel (%p494) target = $region56
      $region55: #{tpu_custom_call.1} parent=5 // pred_region
        %s497 = ssub.s32 %s17, 2
        // Predicated region
        $region57: #{tpu_custom_call.1} parent=55 // pred_check
          %p498 = pneg %p135
        $region58: #{tpu_custom_call.1} parent=55 // pred_check_branch
          %500 = sbr.rel (%p498) target = $region60
        $region59: #{tpu_custom_call.1} parent=55 // pred_region
          %s501 = sand.u32 %s120, 1
          %s502 = scalar_lea.sflag [#allocation4], %s501
          %s503 = sand.u32 %s120, 1
          %s504 = smul.addr %s503, 8
          %s505 = scalar_lea.vmem [#allocation8], %s504
          %506 = dma.done %s502, 128
        $region60: #{tpu_custom_call.1} parent=55 // pred_fallthru
          _
      $region56: #{tpu_custom_call.1} parent=5 // pred_fallthru
        _
    $region6: #{tpu_custom_call.1} parent=1 // loop_footer
      %s21 = sadd.s32 1, %s17
    $region7: #{tpu_custom_call.1} parent=1 // loop_footer_branch
      %16 = sbr.rel target = $region3
    $region8: #{tpu_custom_call.1} parent=1 // loop_exit
      _
    %507 = vsyncpa [#allocation3], 1
    %s508 = scalar_lea.sflag [#allocation3], 1
    %509 = vsyncpa %s508, 1
    %510 = vsyncpa [#allocation6], 1
    %511 = vsyncpa [#allocation4], 1
    %s512 = scalar_lea.sflag [#allocation4], 1
    %513 = vsyncpa %s512, 1

</llo_original>
